<compile_context>
chip_gen: v5e
topology: v5e:2x2
jax: 0.10.0
libtpu: 0.0.40
codegen_flags: <defaults>
</compile_context>

<pallas_src>
import jax
import jax.numpy as jnp
from jax.experimental import pallas as pl
from jax.experimental.pallas import tpu as pltpu

LANE = 128  # lanes per vreg


def _round_up(v: int, m: int) -> int:
    return ((v + m - 1) // m) * m


def _make_kernel(out_dim: int, fast_exp: bool):
    """Builds the fused MLP + per-action-softmax + expectation kernel."""

    def kernel(x_ref, w1_ref, b1_ref, w2_ref, b2_ref, w3_ref, b3_ref,
               ones_ref, bcast_ref, segmask_ref, sup_ref, q_ref):
        f32 = jnp.float32
        wdt = w1_ref.dtype          # matmul-input dtype (f32 or bf16); acc is f32

        # --- MLP hot path (MXU, f32 accumulation) ---
        h1 = jnp.dot(x_ref[...], w1_ref[...], preferred_element_type=f32) + b1_ref[...]
        h1 = jnp.maximum(h1, 0.0)
        h2 = jnp.dot(h1.astype(wdt), w2_ref[...], preferred_element_type=f32) + b2_ref[...]
        h2 = jnp.maximum(h2, 0.0)
        logits = jnp.dot(h2.astype(wdt), w3_ref[...], preferred_element_type=f32) + b3_ref[...]
        # logits: (Bt, padW); tail-pad lanes carry bias -1e30 -> exp() == 0.

        # --- exact per-action max (softmax stabilization identical to reference) ---
        # segmask[a] is 0 on action a's atom lanes, -1e30 elsewhere; bcast[a] is the
        # 0/1 lane indicator of action a.  VPU/XLU slots have slack here (MXU/EUP
        # bound), so this small unrolled loop is effectively free.
        m_b = jnp.zeros_like(logits)
        for a in range(out_dim):
            m_a = jnp.max(logits + segmask_ref[a:a + 1, :], axis=-1, keepdims=True)  # (Bt,1)
            m_b = m_b + m_a * bcast_ref[a:a + 1, :]                                  # (Bt,padW)

        # --- softmax over atoms for every action, one exp pass over padW lanes ---
        z = logits - m_b                       # pad lanes: -1e30 - 0 -> exp == 0
        if fast_exp:
            # Optional bf16 EUP path (v6e/v7x): ~2x transcendental throughput.
            e = jnp.exp(z.astype(jnp.bfloat16)).astype(f32)
        else:
            e = jnp.exp(z)
        s = jnp.dot(e, ones_ref[...], preferred_element_type=f32)    # (Bt, A) sums, >= 1
        inv = 1.0 / s                                                # exact divide, tiny array
        inv_b = jnp.dot(inv, bcast_ref[...], preferred_element_type=f32)  # (Bt, padW)
        p = jnp.maximum(e * inv_b, 0.001)                            # .clamp(min=0.001)
        # Expectation against support; pad lanes / pad output columns have weight 0.
        q = jnp.dot(p, sup_ref[...], preferred_element_type=f32)     # (Bt, q_cols)

        q_ref[...] = q.astype(q_ref.dtype)                           # lane-dense store

    return kernel


def categorical_dqn_forward(x, params, support, out_dim, atom_size,
                            *, compute_dtype=jnp.float32, b_tile=None,
                            fast_exp=False):
    """x: (B, in_dim) f32; returns q: (B, out_dim) f32."""
    f32 = jnp.float32
    w1, b1, w2, b2, w3, b3 = params
    B, in_dim = x.shape
    hidden = w1.shape[1]
    A = out_dim
    W = A * atom_size
    padW = _round_up(W, LANE)          # TOTAL atom width padded to a lane multiple
    q_cols = _round_up(A, LANE)        # lane-dense q output; slice [:, :A] afterwards

    # --- layer-3 weights/bias: pad only the tail up to padW (not per action) ---
    w3p = jnp.zeros((hidden, padW), f32).at[:, :W].set(w3.reshape(hidden, W))
    b3p = jnp.full((1, padW), jnp.float32(-1e30), f32).at[:, :W].set(b3.reshape(1, W))

    # --- per-action segment helpers (built once, outside the kernel; all f32 —
    #     sup_blk in particular must stay f32: support is not bf16-exact) ---
    lane_ids = jnp.arange(padW)
    act_of_lane = lane_ids // atom_size                              # tail lanes -> >= A
    seg = (act_of_lane[None, :] == jnp.arange(A)[:, None]).astype(f32)   # (A, padW) 0/1
    ones_blk = seg.T                                                 # (padW, A): per-action sum
    bcast = seg                                                      # (A, padW): per-action bcast
    segmask = (seg - 1.0) * jnp.float32(1e30)                        # 0 on segment, -1e30 elsewhere
    atom_idx = lane_ids % atom_size
    sup_per_lane = jnp.where(lane_ids < W, support.astype(f32)[atom_idx], 0.0)   # (padW,)
    sup_blk = jnp.zeros((padW, q_cols), f32).at[:, :A].set(ones_blk * sup_per_lane[:, None])

    # --- matmul-input dtype (bf16 halves vmatmul passes + weight/x DMA; acc f32) ---
    w1c = w1.astype(compute_dtype)
    w2c = w2.astype(compute_dtype)
    w3c = w3p.astype(compute_dtype)
    xc = x.astype(compute_dtype)       # pre-cast in the wrapper (no per-step VPU cast)

    # --- batch tiling ---
    # Large tiles amortize the ~0.35us/step fixed overhead; >=2 steps at large B so
    # the "parallel" batch axis can shard across both v7x TensorCores; row cap keeps
    # ~8 live (b_tile, padW) f32 temporaries under ~16 MiB (safe for v7x 64 MiB VMEM).
    align = 8 if jnp.dtype(compute_dtype).itemsize == 4 else 16
    row_cap = max(align, (((16 * 1024 * 1024) // (8 * padW * 4)) // align) * align)
    if b_tile is None:
        b_aligned = _round_up(max(B, 1), align)
        if b_aligned <= 512:
            b_tile = b_aligned                                   # tiny batch: one step
        else:
            b_tile = min(1024, _round_up((b_aligned + 1) // 2, align))   # >= 2 steps
    else:
        b_tile = _round_up(int(b_tile), align)
    b_tile = max(align, min(b_tile, row_cap))

    Bp = _round_up(B, b_tile)
    if Bp != B:
        xc = jnp.pad(xc, ((0, Bp - B), (0, 0)))
    grid = (Bp // b_tile,)

    def _const(shape):
        # Constant operands: same block every grid step -> single-buffer them
        # (halves their VMEM footprint; matters most on v7x's 64 MiB VMEM).
        return pl.BlockSpec(shape, lambda i: (0, 0), pipeline_mode=pl.Buffered(1))

    in_specs = [
        pl.BlockSpec((b_tile, in_dim), lambda i: (i, 0)),        # x: batch-tiled
        _const(w1c.shape), _const(b1.shape),
        _const(w2c.shape), _const(b2.shape),
        _const(w3c.shape), _const(b3p.shape),
        _const(ones_blk.shape), _const(bcast.shape),
        _const(segmask.shape), _const(sup_blk.shape),
    ]
    out_specs = pl.BlockSpec((b_tile, q_cols), lambda i: (i, 0))

    q = pl.pallas_call(
        _make_kernel(A, fast_exp),
        out_shape=jax.ShapeDtypeStruct((Bp, q_cols), f32),
        grid_spec=pltpu.PrefetchScalarGridSpec(
            num_scalar_prefetch=0,
            grid=grid,
            in_specs=in_specs,
            out_specs=out_specs,
        ),
        compiler_params=pltpu.CompilerParams(
            dimension_semantics=("parallel",),
            vmem_limit_bytes=32 * 1024 * 1024,
        ),
    )(xc, w1c, b1, w2c, b2, w3c, b3p, ones_blk, bcast, segmask, sup_blk)

    return q[:B, :A]


def init_params(key, in_dim, out_dim, atom_size):
    """Deterministic parameter init (uniform, PyTorch-Linear-like scale)."""
    ks = jax.random.split(key, 6)

    def lin(kw, kb, fan_in, fan_out):
        bound = 1.0 / (fan_in ** 0.5)
        w = jax.random.uniform(kw, (fan_in, fan_out), jnp.float32, -bound, bound)
        b = jax.random.uniform(kb, (1, fan_out), jnp.float32, -bound, bound)
        return w, b

    w1, b1 = lin(ks[0], ks[1], in_dim, 128)
    w2, b2 = lin(ks[2], ks[3], 128, 128)
    w3, b3 = lin(ks[4], ks[5], 128, out_dim * atom_size)
    return (w1, b1, w2, b2, w3, b3)


def reference_forward(x, params, support, out_dim, atom_size):
    """Plain-JAX reference mirroring the PyTorch module (full f32 precision)."""
    w1, b1, w2, b2, w3, b3 = params
    hp = jax.lax.Precision.HIGHEST
    h1 = jnp.maximum(jnp.dot(x, w1, precision=hp) + b1, 0.0)
    h2 = jnp.maximum(jnp.dot(h1, w2, precision=hp) + b2, 0.0)
    logits = (jnp.dot(h2, w3, precision=hp) + b3).reshape(-1, out_dim, atom_size)
    dist = jax.nn.softmax(logits, axis=-1)
    dist = jnp.clip(dist, 0.001, None)
    return jnp.sum(dist * support[None, None, :], axis=2)


if __name__ == "__main__":
    # Small shapes consistent with the module's forward: flat state vector input.
    B, IN_DIM, OUT_DIM, ATOM = 8, 32, 4, 51
    V_MIN, V_MAX = -10.0, 10.0

    key = jax.random.PRNGKey(0)
    kx, kp, kx2 = jax.random.split(key, 3)

    x = jax.random.normal(kx, (B, IN_DIM), jnp.float32)
    params = init_params(kp, IN_DIM, OUT_DIM, ATOM)
    support = jnp.linspace(V_MIN, V_MAX, ATOM, dtype=jnp.float32)

    q_ref = reference_forward(x, params, support, OUT_DIM, ATOM)

    # f32 MXU path (faithful to the PyTorch module's numerics).
    q = categorical_dqn_forward(x, params, support, OUT_DIM, ATOM)
    q = jax.block_until_ready(q)
    assert q.shape == (B, OUT_DIM)
    assert bool(jnp.all(jnp.isfinite(q)))
    assert jnp.allclose(q, q_ref, atol=1e-3, rtol=1e-3), (q, q_ref)

    # Multi-step grid path (batch padding + "parallel" batch axis across steps).
    B2 = 40
    x2 = jax.random.normal(kx2, (B2, IN_DIM), jnp.float32)
    q2_ref = reference_forward(x2, params, support, OUT_DIM, ATOM)
    q2 = categorical_dqn_forward(x2, params, support, OUT_DIM, ATOM, b_tile=16)
    q2 = jax.block_until_ready(q2)
    assert q2.shape == (B2, OUT_DIM)
    assert jnp.allclose(q2, q2_ref, atol=1e-3, rtol=1e-3), (q2, q2_ref)

    # bf16 matmul-input path (MXU-native on v5e/v6e/v7x), f32 accumulation/softmax.
    q_bf16 = categorical_dqn_forward(x, params, support, OUT_DIM, ATOM,
                                     compute_dtype=jnp.bfloat16)
    q_bf16 = jax.block_until_ready(q_bf16)
    assert jnp.allclose(q_bf16, q_ref, atol=0.15), (q_bf16, q_ref)

    print("KERNEL_OK")
</pallas_src>

<mosaic_0001>
module attributes {stable_mosaic.version = 11 : i64} {
  func.func @kernel(%arg0: i32, %arg1: memref<8x32xf32, #tpu.memory_space<vmem>>, %arg2: memref<32x128xf32, #tpu.memory_space<vmem>>, %arg3: memref<1x128xf32, #tpu.memory_space<vmem>>, %arg4: memref<128x128xf32, #tpu.memory_space<vmem>>, %arg5: memref<1x128xf32, #tpu.memory_space<vmem>>, %arg6: memref<128x256xf32, #tpu.memory_space<vmem>>, %arg7: memref<1x256xf32, #tpu.memory_space<vmem>>, %arg8: memref<256x4xf32, #tpu.memory_space<vmem>>, %arg9: memref<4x256xf32, #tpu.memory_space<vmem>>, %arg10: memref<4x256xf32, #tpu.memory_space<vmem>>, %arg11: memref<256x128xf32, #tpu.memory_space<vmem>>, %arg12: memref<8x128xf32, #tpu.memory_space<vmem>>) attributes {dimension_semantics = [#tpu.dimension_semantics<parallel>], iteration_bounds = array<i64: 1>, scalar_prefetch = 0 : i64, scratch_operands = 0 : i64, tpu.core_type = #tpu.core_type<tc>, window_params = [{transform_indices = @transform_0, window_bounds = array<i64: 8, 32>}, {pipeline_mode = #tpu.pipeline_mode<synchronous>, transform_indices = @transform_1, window_bounds = array<i64: 32, 128>}, {pipeline_mode = #tpu.pipeline_mode<synchronous>, transform_indices = @transform_2, window_bounds = array<i64: 1, 128>}, {pipeline_mode = #tpu.pipeline_mode<synchronous>, transform_indices = @transform_3, window_bounds = array<i64: 128, 128>}, {pipeline_mode = #tpu.pipeline_mode<synchronous>, transform_indices = @transform_4, window_bounds = array<i64: 1, 128>}, {pipeline_mode = #tpu.pipeline_mode<synchronous>, transform_indices = @transform_5, window_bounds = array<i64: 128, 256>}, {pipeline_mode = #tpu.pipeline_mode<synchronous>, transform_indices = @transform_6, window_bounds = array<i64: 1, 256>}, {pipeline_mode = #tpu.pipeline_mode<synchronous>, transform_indices = @transform_7, window_bounds = array<i64: 256, 4>}, {pipeline_mode = #tpu.pipeline_mode<synchronous>, transform_indices = @transform_8, window_bounds = array<i64: 4, 256>}, {pipeline_mode = #tpu.pipeline_mode<synchronous>, transform_indices = @transform_9, window_bounds = array<i64: 4, 256>}, {pipeline_mode = #tpu.pipeline_mode<synchronous>, transform_indices = @transform_10, window_bounds = array<i64: 256, 128>}, {transform_indices = @transform_11, window_bounds = array<i64: 8, 128>}]} {
    %c0 = arith.constant 0 : index
    %c0_0 = arith.constant 0 : index
    %0 = vector.load %arg1[%c0, %c0_0] : memref<8x32xf32, #tpu.memory_space<vmem>>, vector<8x32xf32>
    %c0_1 = arith.constant 0 : index
    %c0_2 = arith.constant 0 : index
    %1 = vector.load %arg2[%c0_1, %c0_2] : memref<32x128xf32, #tpu.memory_space<vmem>>, vector<32x128xf32>
    %cst = arith.constant dense<0.000000e+00> : vector<8x128xf32>
    %2 = tpu.matmul %0, %1, %cst {dimension_numbers = #tpu.dot_dimension_numbers<[1], [0], [0], [1], [0, 0, 1, 1], [], []>} : vector<8x32xf32>, vector<32x128xf32>, vector<8x128xf32> -> vector<8x128xf32>
    %c0_3 = arith.constant 0 : index
    %c0_4 = arith.constant 0 : index
    %3 = vector.load %arg3[%c0_3, %c0_4] : memref<1x128xf32, #tpu.memory_space<vmem>>, vector<1x128xf32>
    %4 = vector.broadcast %3 : vector<1x128xf32> to vector<8x128xf32>
    %5 = arith.addf %2, %4 : vector<8x128xf32>
    %cst_5 = arith.constant 0.000000e+00 : f32
    %6 = vector.broadcast %cst_5 : f32 to vector<8x128xf32>
    %7 = arith.maximumf %5, %6 : vector<8x128xf32>
    %c0_6 = arith.constant 0 : index
    %c0_7 = arith.constant 0 : index
    %8 = vector.load %arg4[%c0_6, %c0_7] : memref<128x128xf32, #tpu.memory_space<vmem>>, vector<128x128xf32>
    %cst_8 = arith.constant dense<0.000000e+00> : vector<8x128xf32>
    %9 = tpu.matmul %7, %8, %cst_8 {dimension_numbers = #tpu.dot_dimension_numbers<[1], [0], [0], [1], [0, 0, 1, 1], [], []>} : vector<8x128xf32>, vector<128x128xf32>, vector<8x128xf32> -> vector<8x128xf32>
    %c0_9 = arith.constant 0 : index
    %c0_10 = arith.constant 0 : index
    %10 = vector.load %arg5[%c0_9, %c0_10] : memref<1x128xf32, #tpu.memory_space<vmem>>, vector<1x128xf32>
    %11 = vector.broadcast %10 : vector<1x128xf32> to vector<8x128xf32>
    %12 = arith.addf %9, %11 : vector<8x128xf32>
    %cst_11 = arith.constant 0.000000e+00 : f32
    %13 = vector.broadcast %cst_11 : f32 to vector<8x128xf32>
    %14 = arith.maximumf %12, %13 : vector<8x128xf32>
    %c0_12 = arith.constant 0 : index
    %c0_13 = arith.constant 0 : index
    %15 = vector.load %arg6[%c0_12, %c0_13] : memref<128x256xf32, #tpu.memory_space<vmem>>, vector<128x256xf32>
    %cst_14 = arith.constant dense<0.000000e+00> : vector<8x256xf32>
    %16 = tpu.matmul %14, %15, %cst_14 {dimension_numbers = #tpu.dot_dimension_numbers<[1], [0], [0], [1], [0, 0, 1, 1], [], []>} : vector<8x128xf32>, vector<128x256xf32>, vector<8x256xf32> -> vector<8x256xf32>
    %c0_15 = arith.constant 0 : index
    %c0_16 = arith.constant 0 : index
    %17 = vector.load %arg7[%c0_15, %c0_16] : memref<1x256xf32, #tpu.memory_space<vmem>>, vector<1x256xf32>
    %18 = vector.broadcast %17 : vector<1x256xf32> to vector<8x256xf32>
    %19 = arith.addf %16, %18 : vector<8x256xf32>
    %cst_17 = arith.constant 0.000000e+00 : f32
    %20 = vector.broadcast %cst_17 : f32 to vector<8x256xf32>
    %c0_18 = arith.constant 0 : index
    %c0_19 = arith.constant 0 : index
    %21 = vector.load %arg10[%c0_18, %c0_19] : memref<4x256xf32, #tpu.memory_space<vmem>>, vector<1x256xf32>
    %22 = vector.broadcast %21 : vector<1x256xf32> to vector<8x256xf32>
    %23 = arith.addf %19, %22 : vector<8x256xf32>
    %cst_20 = arith.constant dense<0xFF800000> : vector<8xf32>
    %24 = vector.multi_reduction <maximumf>, %23, %cst_20 [1] : vector<8x256xf32> to vector<8xf32>
    %25 = vector.shape_cast %24 : vector<8xf32> to vector<8x1xf32>
    %c0_21 = arith.constant 0 : index
    %c0_22 = arith.constant 0 : index
    %26 = vector.load %arg9[%c0_21, %c0_22] : memref<4x256xf32, #tpu.memory_space<vmem>>, vector<1x256xf32>
    %27 = vector.broadcast %25 : vector<8x1xf32> to vector<8x256xf32>
    %28 = vector.broadcast %26 : vector<1x256xf32> to vector<8x256xf32>
    %29 = arith.mulf %27, %28 : vector<8x256xf32>
    %30 = arith.addf %20, %29 : vector<8x256xf32>
    %c1 = arith.constant 1 : index
    %c0_23 = arith.constant 0 : index
    %31 = vector.load %arg10[%c1, %c0_23] : memref<4x256xf32, #tpu.memory_space<vmem>>, vector<1x256xf32>
    %32 = vector.broadcast %31 : vector<1x256xf32> to vector<8x256xf32>
    %33 = arith.addf %19, %32 : vector<8x256xf32>
    %cst_24 = arith.constant dense<0xFF800000> : vector<8xf32>
    %34 = vector.multi_reduction <maximumf>, %33, %cst_24 [1] : vector<8x256xf32> to vector<8xf32>
    %35 = vector.shape_cast %34 : vector<8xf32> to vector<8x1xf32>
    %c1_25 = arith.constant 1 : index
    %c0_26 = arith.constant 0 : index
    %36 = vector.load %arg9[%c1_25, %c0_26] : memref<4x256xf32, #tpu.memory_space<vmem>>, vector<1x256xf32>
    %37 = vector.broadcast %35 : vector<8x1xf32> to vector<8x256xf32>
    %38 = vector.broadcast %36 : vector<1x256xf32> to vector<8x256xf32>
    %39 = arith.mulf %37, %38 : vector<8x256xf32>
    %40 = arith.addf %30, %39 : vector<8x256xf32>
    %c2 = arith.constant 2 : index
    %c0_27 = arith.constant 0 : index
    %41 = vector.load %arg10[%c2, %c0_27] : memref<4x256xf32, #tpu.memory_space<vmem>>, vector<1x256xf32>
    %42 = vector.broadcast %41 : vector<1x256xf32> to vector<8x256xf32>
    %43 = arith.addf %19, %42 : vector<8x256xf32>
    %cst_28 = arith.constant dense<0xFF800000> : vector<8xf32>
    %44 = vector.multi_reduction <maximumf>, %43, %cst_28 [1] : vector<8x256xf32> to vector<8xf32>
    %45 = vector.shape_cast %44 : vector<8xf32> to vector<8x1xf32>
    %c2_29 = arith.constant 2 : index
    %c0_30 = arith.constant 0 : index
    %46 = vector.load %arg9[%c2_29, %c0_30] : memref<4x256xf32, #tpu.memory_space<vmem>>, vector<1x256xf32>
    %47 = vector.broadcast %45 : vector<8x1xf32> to vector<8x256xf32>
    %48 = vector.broadcast %46 : vector<1x256xf32> to vector<8x256xf32>
    %49 = arith.mulf %47, %48 : vector<8x256xf32>
    %50 = arith.addf %40, %49 : vector<8x256xf32>
    %c3 = arith.constant 3 : index
    %c0_31 = arith.constant 0 : index
    %51 = vector.load %arg10[%c3, %c0_31] : memref<4x256xf32, #tpu.memory_space<vmem>>, vector<1x256xf32>
    %52 = vector.broadcast %51 : vector<1x256xf32> to vector<8x256xf32>
    %53 = arith.addf %19, %52 : vector<8x256xf32>
    %cst_32 = arith.constant dense<0xFF800000> : vector<8xf32>
    %54 = vector.multi_reduction <maximumf>, %53, %cst_32 [1] : vector<8x256xf32> to vector<8xf32>
    %55 = vector.shape_cast %54 : vector<8xf32> to vector<8x1xf32>
    %c3_33 = arith.constant 3 : index
    %c0_34 = arith.constant 0 : index
    %56 = vector.load %arg9[%c3_33, %c0_34] : memref<4x256xf32, #tpu.memory_space<vmem>>, vector<1x256xf32>
    %57 = vector.broadcast %55 : vector<8x1xf32> to vector<8x256xf32>
    %58 = vector.broadcast %56 : vector<1x256xf32> to vector<8x256xf32>
    %59 = arith.mulf %57, %58 : vector<8x256xf32>
    %60 = arith.addf %50, %59 : vector<8x256xf32>
    %61 = arith.subf %19, %60 : vector<8x256xf32>
    %62 = math.exp %61 : vector<8x256xf32>
    %c0_35 = arith.constant 0 : index
    %c0_36 = arith.constant 0 : index
    %63 = vector.load %arg8[%c0_35, %c0_36] : memref<256x4xf32, #tpu.memory_space<vmem>>, vector<256x4xf32>
    %cst_37 = arith.constant dense<0.000000e+00> : vector<8x4xf32>
    %64 = tpu.matmul %62, %63, %cst_37 {dimension_numbers = #tpu.dot_dimension_numbers<[1], [0], [0], [1], [0, 0, 1, 1], [], []>} : vector<8x256xf32>, vector<256x4xf32>, vector<8x4xf32> -> vector<8x4xf32>
    %cst_38 = arith.constant 1.000000e+00 : f32
    %65 = vector.broadcast %cst_38 : f32 to vector<8x4xf32>
    %66 = arith.divf %65, %64 : vector<8x4xf32>
    %c0_39 = arith.constant 0 : index
    %c0_40 = arith.constant 0 : index
    %67 = vector.load %arg9[%c0_39, %c0_40] : memref<4x256xf32, #tpu.memory_space<vmem>>, vector<4x256xf32>
    %cst_41 = arith.constant dense<0.000000e+00> : vector<8x256xf32>
    %68 = tpu.matmul %66, %67, %cst_41 {dimension_numbers = #tpu.dot_dimension_numbers<[1], [0], [0], [1], [0, 0, 1, 1], [], []>} : vector<8x4xf32>, vector<4x256xf32>, vector<8x256xf32> -> vector<8x256xf32>
    %69 = arith.mulf %62, %68 : vector<8x256xf32>
    %cst_42 = arith.constant 1.000000e-03 : f32
    %70 = vector.broadcast %cst_42 : f32 to vector<8x256xf32>
    %71 = arith.maximumf %69, %70 : vector<8x256xf32>
    %c0_43 = arith.constant 0 : index
    %c0_44 = arith.constant 0 : index
    %72 = vector.load %arg11[%c0_43, %c0_44] : memref<256x128xf32, #tpu.memory_space<vmem>>, vector<256x128xf32>
    %cst_45 = arith.constant dense<0.000000e+00> : vector<8x128xf32>
    %73 = tpu.matmul %71, %72, %cst_45 {dimension_numbers = #tpu.dot_dimension_numbers<[1], [0], [0], [1], [0, 0, 1, 1], [], []>} : vector<8x256xf32>, vector<256x128xf32>, vector<8x128xf32> -> vector<8x128xf32>
    %c0_46 = arith.constant 0 : index
    %c0_47 = arith.constant 0 : index
    %74 = vector.load %arg12[%c0_46, %c0_47] : memref<8x128xf32, #tpu.memory_space<vmem>>, vector<8x128xf32>
    tpu.vector_store %arg12[%c0_46, %c0_47], %73 {strides = array<i32>} : memref<8x128xf32, #tpu.memory_space<vmem>>, vector<8x128xf32>,
    return
  }
  func.func @transform_0(%arg0: i32) -> (i32, i32) {
    %c0_i32 = arith.constant 0 : i32
    %c0_i32_0 = arith.constant 0 : i32
    return %arg0, %c0_i32 : i32, i32
  }
  func.func @transform_1(%arg0: i32) -> (i32, i32) {
    %c0_i32 = arith.constant 0 : i32
    %c0_i32_0 = arith.constant 0 : i32
    %c0_i32_1 = arith.constant 0 : i32
    return %c0_i32, %c0_i32_0 : i32, i32
  }
  func.func @transform_2(%arg0: i32) -> (i32, i32) {
    %c0_i32 = arith.constant 0 : i32
    %c0_i32_0 = arith.constant 0 : i32
    %c0_i32_1 = arith.constant 0 : i32
    return %c0_i32, %c0_i32_0 : i32, i32
  }
  func.func @transform_3(%arg0: i32) -> (i32, i32) {
    %c0_i32 = arith.constant 0 : i32
    %c0_i32_0 = arith.constant 0 : i32
    %c0_i32_1 = arith.constant 0 : i32
    return %c0_i32, %c0_i32_0 : i32, i32
  }
  func.func @transform_4(%arg0: i32) -> (i32, i32) {
    %c0_i32 = arith.constant 0 : i32
    %c0_i32_0 = arith.constant 0 : i32
    %c0_i32_1 = arith.constant 0 : i32
    return %c0_i32, %c0_i32_0 : i32, i32
  }
  func.func @transform_5(%arg0: i32) -> (i32, i32) {
    %c0_i32 = arith.constant 0 : i32
    %c0_i32_0 = arith.constant 0 : i32
    %c0_i32_1 = arith.constant 0 : i32
    return %c0_i32, %c0_i32_0 : i32, i32
  }
  func.func @transform_6(%arg0: i32) -> (i32, i32) {
    %c0_i32 = arith.constant 0 : i32
    %c0_i32_0 = arith.constant 0 : i32
    %c0_i32_1 = arith.constant 0 : i32
    return %c0_i32, %c0_i32_0 : i32, i32
  }
  func.func @transform_7(%arg0: i32) -> (i32, i32) {
    %c0_i32 = arith.constant 0 : i32
    %c0_i32_0 = arith.constant 0 : i32
    %c0_i32_1 = arith.constant 0 : i32
    return %c0_i32, %c0_i32_0 : i32, i32
  }
  func.func @transform_8(%arg0: i32) -> (i32, i32) {
    %c0_i32 = arith.constant 0 : i32
    %c0_i32_0 = arith.constant 0 : i32
    %c0_i32_1 = arith.constant 0 : i32
    return %c0_i32, %c0_i32_0 : i32, i32
  }
  func.func @transform_9(%arg0: i32) -> (i32, i32) {
    %c0_i32 = arith.constant 0 : i32
    %c0_i32_0 = arith.constant 0 : i32
    %c0_i32_1 = arith.constant 0 : i32
    return %c0_i32, %c0_i32_0 : i32, i32
  }
  func.func @transform_10(%arg0: i32) -> (i32, i32) {
    %c0_i32 = arith.constant 0 : i32
    %c0_i32_0 = arith.constant 0 : i32
    %c0_i32_1 = arith.constant 0 : i32
    return %c0_i32, %c0_i32_0 : i32, i32
  }
  func.func @transform_11(%arg0: i32) -> (i32, i32) {
    %c0_i32 = arith.constant 0 : i32
    %c0_i32_0 = arith.constant 0 : i32
    return %arg0, %c0_i32 : i32, i32
  }
}

</mosaic_0001>

<llo_original>
// kernel: tpu_custom_call.1
$region0: #{tpu_custom_call.1}
  #allocation0 [shape = 'u32[]', space=smem, size = 0x4, offset = 0x4, fixed_abs, tag = 'smem constant byte address 0x4 - core index']
  #allocation1 [shape = 'u32[72,128]{1,0:T(1,128)}', space=vmem, size = 0x9000, scoped, tag = 'internal scratch']
  %s0 = inlined_call_operand.vmem [shape: f32[8,32], index: 0, kind: input, shape index: {}]
  %s1 = inlined_call_operand.hbm [shape: f32[32,128], index: 1, kind: input, shape index: {}]
  %s2 = inlined_call_operand.hbm [shape: f32[1,128], index: 2, kind: input, shape index: {}]
  %s3 = inlined_call_operand.hbm [shape: f32[128,128], index: 3, kind: input, shape index: {}]
  %s4 = inlined_call_operand.hbm [shape: f32[1,128], index: 4, kind: input, shape index: {}]
  %s5 = inlined_call_operand.vmem [shape: f32[128,256], index: 5, kind: input, shape index: {}]
  %s6 = inlined_call_operand.hbm [shape: f32[1,256], index: 6, kind: input, shape index: {}]
  %s7 = inlined_call_operand.vmem [shape: f32[256,4], index: 7, kind: input, shape index: {}]
  %s8 = inlined_call_operand.hbm [shape: f32[4,256], index: 8, kind: input, shape index: {}]
  %s9 = inlined_call_operand.vmem [shape: f32[4,256], index: 9, kind: input, shape index: {}]
  %s10 = inlined_call_operand.hbm [shape: f32[256,128], index: 10, kind: input, shape index: {}]
  %s11 = inlined_call_operand.hbm [shape: f32[8,128], index: 11, kind: output, shape index: {}]
  %s12 = sld [smem:[#allocation0]]
  $region82: #{tpu_custom_call.1} parent=0
    _
  %s14 = ssub.s32 1, %s12
  %s15 = scalar_select 0, %s14, %s12
  $region1: #{tpu_custom_call.1} parent=0
    #allocation2 [shape = 'u8[16384]{0}', space=vmem, size = 0x4000, scoped, tag = 'input window, operand 1, single buffered']
    #allocation3 [shape = 's32[1]{0}', space=sflag, size = 0x4, scoped, tag = 'scoped memory for tpu_custom_call.1']
    #allocation4 [shape = 's32[1]{0}', space=sflag, size = 0x4, scoped, tag = 'scoped memory for tpu_custom_call.1']
    #allocation5 [shape = 'u8[512]{0}', space=vmem, size = 0x400, scoped, tag = 'input window, operand 2, single buffered']
    #allocation6 [shape = 's32[1]{0}', space=sflag, size = 0x4, scoped, tag = 'scoped memory for tpu_custom_call.1']
    #allocation7 [shape = 'u8[65536]{0}', space=vmem, size = 0x10000, scoped, tag = 'input window, operand 3, single buffered']
    #allocation8 [shape = 'u8[512]{0}', space=vmem, size = 0x400, scoped, tag = 'input window, operand 4, single buffered']
    #allocation9 [shape = 's32[1]{0}', space=sflag, size = 0x4, scoped, tag = 'scoped memory for tpu_custom_call.1']
    #allocation10 [shape = 'u8[1024]{0}', space=vmem, size = 0x400, scoped, tag = 'input window, operand 6, single buffered']
    #allocation11 [shape = 'u8[4096]{0}', space=vmem, size = 0x1000, scoped, tag = 'input window, operand 8, single buffered']
    #allocation12 [shape = 's32[1]{0}', space=sflag, size = 0x4, scoped, tag = 'scoped memory for tpu_custom_call.1']
    #allocation13 [shape = 'u8[131072]{0}', space=vmem, size = 0x20000, scoped, tag = 'input window, operand 10, single buffered']
    #allocation14 [shape = 'u8[4096]{0}', space=vmem, size = 0x1000, scoped, tag = 'output window, operand 0, single buffered']
    %16 = vsyncpa [#allocation3], 0
    %17 = vsyncpa [#allocation6], 0
    %18 = vsyncpa [#allocation9], 0
    %19 = vsyncpa [#allocation12], 0
    %20 = vsyncpa [#allocation4], 0
    // Predicated region
    $region2: #{tpu_custom_call.1} parent=1 // pred_check
      _
    $region3: #{tpu_custom_call.1} parent=1 // pred_check_branch
      %22 = sbr.rel (0) target = $region5
    $region4: #{tpu_custom_call.1} parent=1 // pred_region
      _
    $region5: #{tpu_custom_call.1} parent=1 // pred_fallthru
      _
    // Predicated region
    $region6: #{tpu_custom_call.1} parent=1 // pred_check
      _
    $region7: #{tpu_custom_call.1} parent=1 // pred_check_branch
      %24 = sbr.rel (0) target = $region9
    $region8: #{tpu_custom_call.1} parent=1 // pred_region
      %26 = vsyncadd [#allocation3], 0
      %s27 = sshll.u32 %s1, 4
      %s28 = int_to_ptr.hbm [resolvable:$true] %s27
      %s29 = sshll.u32 [#allocation2], 4
      %s30 = int_to_ptr.vmem [resolvable:$true] %s29
      %35 = dma.hbm_to_vmem [thread:$0]  %s28, 512, %s30, [#allocation3], 128, 128, 8
    $region9: #{tpu_custom_call.1} parent=1 // pred_fallthru
      _
    // Predicated region
    $region10: #{tpu_custom_call.1} parent=1 // pred_check
      _
    $region11: #{tpu_custom_call.1} parent=1 // pred_check_branch
      %37 = sbr.rel (0) target = $region13
    $region12: #{tpu_custom_call.1} parent=1 // pred_region
      %39 = vsyncadd [#allocation6], 0
      %s41 = sshll.u32 %s2, 4
      %s42 = int_to_ptr.hbm [resolvable:$true] %s41
      %s43 = sshll.u32 [#allocation5], 4
      %s44 = int_to_ptr.vmem [resolvable:$true] %s43
      %46 = dma.hbm_to_vmem [thread:$0]  %s42, 16, %s44, [#allocation6]
    $region13: #{tpu_custom_call.1} parent=1 // pred_fallthru
      _
    // Predicated region
    $region14: #{tpu_custom_call.1} parent=1 // pred_check
      _
    $region15: #{tpu_custom_call.1} parent=1 // pred_check_branch
      %48 = sbr.rel (0) target = $region17
    $region16: #{tpu_custom_call.1} parent=1 // pred_region
      %50 = vsyncadd [#allocation6], 0
      %s51 = sshll.u32 %s3, 4
      %s52 = int_to_ptr.hbm [resolvable:$true] %s51
      %s53 = sshll.u32 [#allocation7], 4
      %s54 = int_to_ptr.vmem [resolvable:$true] %s53
      %59 = dma.hbm_to_vmem [thread:$0]  %s52, 2048, %s54, [#allocation6], 128, 128, 8
    $region17: #{tpu_custom_call.1} parent=1 // pred_fallthru
      _
    // Predicated region
    $region18: #{tpu_custom_call.1} parent=1 // pred_check
      _
    $region19: #{tpu_custom_call.1} parent=1 // pred_check_branch
      %61 = sbr.rel (0) target = $region21
    $region20: #{tpu_custom_call.1} parent=1 // pred_region
      %63 = vsyncadd [#allocation9], 0
      %s65 = sshll.u32 %s4, 4
      %s66 = int_to_ptr.hbm [resolvable:$true] %s65
      %s67 = sshll.u32 [#allocation8], 4
      %s68 = int_to_ptr.vmem [resolvable:$true] %s67
      %70 = dma.hbm_to_vmem [thread:$0]  %s66, 16, %s68, [#allocation9]
    $region21: #{tpu_custom_call.1} parent=1 // pred_fallthru
      _
    // Predicated region
    $region22: #{tpu_custom_call.1} parent=1 // pred_check
      _
    $region23: #{tpu_custom_call.1} parent=1 // pred_check_branch
      %72 = sbr.rel (0) target = $region25
    $region24: #{tpu_custom_call.1} parent=1 // pred_region
      _
    $region25: #{tpu_custom_call.1} parent=1 // pred_fallthru
      _
    // Predicated region
    $region26: #{tpu_custom_call.1} parent=1 // pred_check
      _
    $region27: #{tpu_custom_call.1} parent=1 // pred_check_branch
      %74 = sbr.rel (0) target = $region29
    $region28: #{tpu_custom_call.1} parent=1 // pred_region
      %76 = vsyncadd [#allocation9], 0
      %s78 = sshll.u32 %s6, 4
      %s79 = int_to_ptr.hbm [resolvable:$true] %s78
      %s80 = sshll.u32 [#allocation10], 4
      %s81 = int_to_ptr.vmem [resolvable:$true] %s80
      %83 = dma.hbm_to_vmem [thread:$0]  %s79, 32, %s81, [#allocation9]
    $region29: #{tpu_custom_call.1} parent=1 // pred_fallthru
      _
    // Predicated region
    $region30: #{tpu_custom_call.1} parent=1 // pred_check
      _
    $region31: #{tpu_custom_call.1} parent=1 // pred_check_branch
      %85 = sbr.rel (0) target = $region33
    $region32: #{tpu_custom_call.1} parent=1 // pred_region
      _
    $region33: #{tpu_custom_call.1} parent=1 // pred_fallthru
      _
    // Predicated region
    $region34: #{tpu_custom_call.1} parent=1 // pred_check
      _
    $region35: #{tpu_custom_call.1} parent=1 // pred_check_branch
      %87 = sbr.rel (0) target = $region37
    $region36: #{tpu_custom_call.1} parent=1 // pred_region
      %89 = vsyncadd [#allocation12], 0
      %s91 = sshll.u32 %s8, 4
      %s92 = int_to_ptr.hbm [resolvable:$true] %s91
      %s93 = sshll.u32 [#allocation11], 4
      %s94 = int_to_ptr.vmem [resolvable:$true] %s93
      %96 = dma.hbm_to_vmem [thread:$0]  %s92, 128, %s94, [#allocation12]
    $region37: #{tpu_custom_call.1} parent=1 // pred_fallthru
      _
    // Predicated region
    $region38: #{tpu_custom_call.1} parent=1 // pred_check
      _
    $region39: #{tpu_custom_call.1} parent=1 // pred_check_branch
      %98 = sbr.rel (0) target = $region41
    $region40: #{tpu_custom_call.1} parent=1 // pred_region
      _
    $region41: #{tpu_custom_call.1} parent=1 // pred_fallthru
      _
    // Predicated region
    $region42: #{tpu_custom_call.1} parent=1 // pred_check
      _
    $region43: #{tpu_custom_call.1} parent=1 // pred_check_branch
      %100 = sbr.rel (0) target = $region45
    $region44: #{tpu_custom_call.1} parent=1 // pred_region
      %102 = vsyncadd [#allocation12], 0
      %s103 = sshll.u32 %s10, 4
      %s104 = int_to_ptr.hbm [resolvable:$true] %s103
      %s105 = sshll.u32 [#allocation13], 4
      %s106 = int_to_ptr.vmem [resolvable:$true] %s105
      %111 = dma.hbm_to_vmem [thread:$0]  %s104, 4096, %s106, [#allocation12], 128, 128, 8
    $region45: #{tpu_custom_call.1} parent=1 // pred_fallthru
      _
    // Predicated region
    $region46: #{tpu_custom_call.1} parent=1 // pred_check
      _
    $region47: #{tpu_custom_call.1} parent=1 // pred_check_branch
      %113 = sbr.rel (0) target = $region49
    $region48: #{tpu_custom_call.1} parent=1 // pred_region
      %115 = dma.done [#allocation3], 512
    $region49: #{tpu_custom_call.1} parent=1 // pred_fallthru
      _
    // Predicated region
    $region50: #{tpu_custom_call.1} parent=1 // pred_check
      _
    $region51: #{tpu_custom_call.1} parent=1 // pred_check_branch
      %117 = sbr.rel (0) target = $region53
    $region52: #{tpu_custom_call.1} parent=1 // pred_region
      %119 = dma.done [#allocation6], 16
    $region53: #{tpu_custom_call.1} parent=1 // pred_fallthru
      _
    // Predicated region
    $region54: #{tpu_custom_call.1} parent=1 // pred_check
      _
    $region55: #{tpu_custom_call.1} parent=1 // pred_check_branch
      %121 = sbr.rel (0) target = $region57
    $region56: #{tpu_custom_call.1} parent=1 // pred_region
      %123 = dma.done [#allocation6], 2048
    $region57: #{tpu_custom_call.1} parent=1 // pred_fallthru
      _
    // Predicated region
    $region58: #{tpu_custom_call.1} parent=1 // pred_check
      _
    $region59: #{tpu_custom_call.1} parent=1 // pred_check_branch
      %125 = sbr.rel (0) target = $region61
    $region60: #{tpu_custom_call.1} parent=1 // pred_region
      %127 = dma.done [#allocation9], 16
    $region61: #{tpu_custom_call.1} parent=1 // pred_fallthru
      _
    // Predicated region
    $region62: #{tpu_custom_call.1} parent=1 // pred_check
      _
    $region63: #{tpu_custom_call.1} parent=1 // pred_check_branch
      %129 = sbr.rel (0) target = $region65
    $region64: #{tpu_custom_call.1} parent=1 // pred_region
      %131 = dma.done [#allocation9], 32
    $region65: #{tpu_custom_call.1} parent=1 // pred_fallthru
      _
    // Predicated region
    $region66: #{tpu_custom_call.1} parent=1 // pred_check
      _
    $region67: #{tpu_custom_call.1} parent=1 // pred_check_branch
      %133 = sbr.rel (0) target = $region69
    $region68: #{tpu_custom_call.1} parent=1 // pred_region
      %135 = dma.done [#allocation12], 128
    $region69: #{tpu_custom_call.1} parent=1 // pred_fallthru
      _
    // Predicated region
    $region70: #{tpu_custom_call.1} parent=1 // pred_check
      _
    $region71: #{tpu_custom_call.1} parent=1 // pred_check_branch
      %137 = sbr.rel (0) target = $region73
    $region72: #{tpu_custom_call.1} parent=1 // pred_region
      %139 = dma.done [#allocation12], 4096
    $region73: #{tpu_custom_call.1} parent=1 // pred_fallthru
      _
    %v140 = vld [vmem:[%s0] sm:$0xff]
    %v141 = vld [vmem:[#allocation2] sm:$0xff]
    %v142 = vld [vmem:[#allocation2 + $0x8] sm:$0xff]
    %v143 = vld [vmem:[#allocation2 + $0x10] sm:$0xff]
    %v144 = vld [vmem:[#allocation2 + $0x18] sm:$0xff]
    %v145 = vld [vmem:[#allocation5] sm:$0x1]
    %v147 = vperm.slane %v145, 0
    %vm149 = vcmask 261120
    %v151 = vsel %vm149, %v140, 0
    %153 = vmatpush.msra.mxu0 0.0
    %154 = vmatpush.msra.mxu0 0.0
    %155 = vmatpush.msra.mxu0 0.0
    %156 = vmatpush.msra.mxu0 0.0
    %157 = vmatpush.msra.mxu0 0.0
    %158 = vmatpush.msra.mxu0 0.0
    %159 = vmatpush.msra.mxu0 0.0
    %160 = vmatpush.msra.mxu0 0.0
    %161 = vmatpush.msra.mxu0 0.0
    %162 = vmatpush.msra.mxu0 0.0
    %163 = vmatpush.msra.mxu0 0.0
    %164 = vmatpush.msra.mxu0 0.0
    %165 = vmatpush.msra.mxu0 %v144
    %166 = vmatpush.msra.mxu0 %v143
    %167 = vmatpush.msra.mxu0 %v142
    %168 = vmatpush.msra.mxu0 %v141
    %169 = vmatmul.f32.gmra.mxu0 %v151
    %v170 = vpop.f32.mrf.mxu0
    %v171 = vadd.f32 %v147, %v170
    %172 = vdwg.mxu0
    %v173 = vmax.f32 %v171, 0.0
    %v174 = vld [vmem:[#allocation7] sm:$0xff]
    %v175 = vld [vmem:[#allocation7 + $0x8] sm:$0xff]
    %v176 = vld [vmem:[#allocation7 + $0x10] sm:$0xff]
    %v177 = vld [vmem:[#allocation7 + $0x18] sm:$0xff]
    %v178 = vld [vmem:[#allocation7 + $0x20] sm:$0xff]
    %v179 = vld [vmem:[#allocation7 + $0x28] sm:$0xff]
    %v180 = vld [vmem:[#allocation7 + $0x30] sm:$0xff]
    %v181 = vld [vmem:[#allocation7 + $0x38] sm:$0xff]
    %v182 = vld [vmem:[#allocation7 + $0x40] sm:$0xff]
    %v183 = vld [vmem:[#allocation7 + $0x48] sm:$0xff]
    %v184 = vld [vmem:[#allocation7 + $0x50] sm:$0xff]
    %v185 = vld [vmem:[#allocation7 + $0x58] sm:$0xff]
    %v186 = vld [vmem:[#allocation7 + $0x60] sm:$0xff]
    %v187 = vld [vmem:[#allocation7 + $0x68] sm:$0xff]
    %v188 = vld [vmem:[#allocation7 + $0x70] sm:$0xff]
    %v189 = vld [vmem:[#allocation7 + $0x78] sm:$0xff]
    %v190 = vld [vmem:[#allocation8] sm:$0x1]
    %v192 = vperm.slane %v190, 0
    %194 = vmatpush.msra.mxu0 %v189
    %195 = vmatpush.msra.mxu0 %v188
    %196 = vmatpush.msra.mxu0 %v187
    %197 = vmatpush.msra.mxu0 %v186
    %198 = vmatpush.msra.mxu0 %v185
    %199 = vmatpush.msra.mxu0 %v184
    %200 = vmatpush.msra.mxu0 %v183
    %201 = vmatpush.msra.mxu0 %v182
    %202 = vmatpush.msra.mxu0 %v181
    %203 = vmatpush.msra.mxu0 %v180
    %204 = vmatpush.msra.mxu0 %v179
    %205 = vmatpush.msra.mxu0 %v178
    %206 = vmatpush.msra.mxu0 %v177
    %207 = vmatpush.msra.mxu0 %v176
    %208 = vmatpush.msra.mxu0 %v175
    %209 = vmatpush.msra.mxu0 %v174
    %210 = vmatmul.f32.gmra.mxu0 %v173
    %v211 = vpop.f32.mrf.mxu0
    %v212 = vadd.f32 %v192, %v211
    %213 = vdwg.mxu0
    %v214 = vmax.f32 %v212, 0.0
    %v215 = vld [vmem:[%s5] sm:$0xff]
    %v216 = vld [vmem:[%s5 + $0x8] sm:$0xff]
    %v217 = vld [vmem:[%s5 + $0x10] sm:$0xff]
    %v218 = vld [vmem:[%s5 + $0x18] sm:$0xff]
    %v219 = vld [vmem:[%s5 + $0x20] sm:$0xff]
    %v220 = vld [vmem:[%s5 + $0x28] sm:$0xff]
    %v221 = vld [vmem:[%s5 + $0x30] sm:$0xff]
    %v222 = vld [vmem:[%s5 + $0x38] sm:$0xff]
    %v223 = vld [vmem:[%s5 + $0x40] sm:$0xff]
    %v224 = vld [vmem:[%s5 + $0x48] sm:$0xff]
    %v225 = vld [vmem:[%s5 + $0x50] sm:$0xff]
    %v226 = vld [vmem:[%s5 + $0x58] sm:$0xff]
    %v227 = vld [vmem:[%s5 + $0x60] sm:$0xff]
    %v228 = vld [vmem:[%s5 + $0x68] sm:$0xff]
    %v229 = vld [vmem:[%s5 + $0x70] sm:$0xff]
    %v230 = vld [vmem:[%s5 + $0x78] sm:$0xff]
    %v231 = vld [vmem:[%s5 + $0x80] sm:$0xff]
    %v232 = vld [vmem:[%s5 + $0x88] sm:$0xff]
    %v233 = vld [vmem:[%s5 + $0x90] sm:$0xff]
    %v234 = vld [vmem:[%s5 + $0x98] sm:$0xff]
    %v235 = vld [vmem:[%s5 + $0xa0] sm:$0xff]
    %v236 = vld [vmem:[%s5 + $0xa8] sm:$0xff]
    %v237 = vld [vmem:[%s5 + $0xb0] sm:$0xff]
    %v238 = vld [vmem:[%s5 + $0xb8] sm:$0xff]
    %v239 = vld [vmem:[%s5 + $0xc0] sm:$0xff]
    %v240 = vld [vmem:[%s5 + $0xc8] sm:$0xff]
    %v241 = vld [vmem:[%s5 + $0xd0] sm:$0xff]
    %v242 = vld [vmem:[%s5 + $0xd8] sm:$0xff]
    %v243 = vld [vmem:[%s5 + $0xe0] sm:$0xff]
    %v244 = vld [vmem:[%s5 + $0xe8] sm:$0xff]
    %v245 = vld [vmem:[%s5 + $0xf0] sm:$0xff]
    %v246 = vld [vmem:[%s5 + $0xf8] sm:$0xff]
    %v247 = vld [vmem:[#allocation10] sm:$0x3]
    %v249 = vperm.slane %v247, 0
    %v250 = vperm.slane %v247, 1
    %253 = vmatpush.msra.mxu0 %v245
    %254 = vmatpush.msra.mxu0 %v243
    %255 = vmatpush.msra.mxu0 %v241
    %256 = vmatpush.msra.mxu0 %v239
    %257 = vmatpush.msra.mxu0 %v237
    %258 = vmatpush.msra.mxu0 %v235
    %259 = vmatpush.msra.mxu0 %v233
    %260 = vmatpush.msra.mxu0 %v231
    %261 = vmatpush.msra.mxu0 %v229
    %262 = vmatpush.msra.mxu0 %v227
    %263 = vmatpush.msra.mxu0 %v225
    %264 = vmatpush.msra.mxu0 %v223
    %265 = vmatpush.msra.mxu0 %v221
    %266 = vmatpush.msra.mxu0 %v219
    %267 = vmatpush.msra.mxu0 %v217
    %268 = vmatpush.msra.mxu0 %v215
    %269 = vmatmul.f32.gmra.mxu0 %v214
    %v270 = vpop.f32.mrf.mxu0
    %v271 = vadd.f32 %v249, %v270
    %272 = vdwg.mxu0
    %273 = vmatpush.msra.mxu0 %v246
    %274 = vmatpush.msra.mxu0 %v244
    %275 = vmatpush.msra.mxu0 %v242
    %276 = vmatpush.msra.mxu0 %v240
    %277 = vmatpush.msra.mxu0 %v238
    %278 = vmatpush.msra.mxu0 %v236
    %279 = vmatpush.msra.mxu0 %v234
    %280 = vmatpush.msra.mxu0 %v232
    %281 = vmatpush.msra.mxu0 %v230
    %282 = vmatpush.msra.mxu0 %v228
    %283 = vmatpush.msra.mxu0 %v226
    %284 = vmatpush.msra.mxu0 %v224
    %285 = vmatpush.msra.mxu0 %v222
    %286 = vmatpush.msra.mxu0 %v220
    %287 = vmatpush.msra.mxu0 %v218
    %288 = vmatpush.msra.mxu0 %v216
    %289 = vmatmul.f32.gmra.mxu0 %v214
    %v290 = vpop.f32.mrf.mxu0
    %v291 = vadd.f32 %v250, %v290
    %292 = vdwg.mxu0
    %v293 = vld [vmem:[%s9] ss:$4 sm:$0x3]
    %v295 = vperm.slane %v293, 0
    %v296 = vperm.slane %v293, 1
    %v299 = vadd.f32 %v271, %v295
    %v300 = vadd.f32 %v291, %v296
    %v301 = vmax.f32 %v299, %v300
    %302 = vmax.xlane.f32.xlu0 %v301
    %v303 = vpop.xlane.xlu0 %302
    %v304 = vld [vmem:[#allocation11] ss:$4 sm:$0x3]
    %v306 = vperm.slane %v304, 0
    %v307 = vperm.slane %v304, 1
    %v310 = vmul.f32 %v303, %v306
    %v311 = vmul.f32 %v303, %v307
    %v312 = vadd.f32 %v310, 0.0
    %v313 = vadd.f32 %v311, 0.0
    %s314 = scalar_lea.vmem %s9, 1
    %v315 = vld [vmem:[%s314] ss:$4 sm:$0x3]
    %v317 = vperm.slane %v315, 0
    %v318 = vperm.slane %v315, 1
    %v321 = vadd.f32 %v271, %v317
    %v322 = vadd.f32 %v291, %v318
    %v323 = vmax.f32 %v321, %v322
    %324 = vmax.xlane.f32.xlu0 %v323
    %v325 = vpop.xlane.xlu0 %324
    %s326 = scalar_lea.vmem [#allocation11], 1
    %v327 = vld [vmem:[%s326] ss:$4 sm:$0x3]
    %v329 = vperm.slane %v327, 0
    %v330 = vperm.slane %v327, 1
    %v333 = vmul.f32 %v325, %v329
    %v334 = vmul.f32 %v325, %v330
    %v335 = vadd.f32 %v312, %v333
    %v336 = vadd.f32 %v313, %v334
    %s337 = scalar_lea.vmem %s9, 2
    %v338 = vld [vmem:[%s337] ss:$4 sm:$0x3]
    %v340 = vperm.slane %v338, 0
    %v341 = vperm.slane %v338, 1
    %v344 = vadd.f32 %v271, %v340
    %v345 = vadd.f32 %v291, %v341
    %v346 = vmax.f32 %v344, %v345
    %347 = vmax.xlane.f32.xlu0 %v346
    %v348 = vpop.xlane.xlu0 %347
    %s349 = scalar_lea.vmem [#allocation11], 2
    %v350 = vld [vmem:[%s349] ss:$4 sm:$0x3]
    %v352 = vperm.slane %v350, 0
    %v353 = vperm.slane %v350, 1
    %v356 = vmul.f32 %v348, %v352
    %v357 = vmul.f32 %v348, %v353
    %v358 = vadd.f32 %v335, %v356
    %v359 = vadd.f32 %v336, %v357
    %s360 = scalar_lea.vmem %s9, 3
    %v361 = vld [vmem:[%s360] ss:$4 sm:$0x3]
    %v363 = vperm.slane %v361, 0
    %v364 = vperm.slane %v361, 1
    %v367 = vadd.f32 %v271, %v363
    %v368 = vadd.f32 %v291, %v364
    %v369 = vmax.f32 %v367, %v368
    %370 = vmax.xlane.f32.xlu0 %v369
    %v371 = vpop.xlane.xlu0 %370
    %s372 = scalar_lea.vmem [#allocation11], 3
    %v373 = vld [vmem:[%s372] ss:$4 sm:$0x3]
    %v375 = vperm.slane %v373, 0
    %v376 = vperm.slane %v373, 1
    %v379 = vmul.f32 %v371, %v375
    %v380 = vmul.f32 %v371, %v376
    %v381 = vadd.f32 %v358, %v379
    %v382 = vadd.f32 %v359, %v380
    %v383 = vsub.f32 %v271, %v381
    %v384 = vsub.f32 %v291, %v382
    %v385 = vmul.f32 %v383, 1.442695
    %v386 = vpow.pop %v385
    %v387 = vmul.f32 %v384, 1.442695
    %v388 = vpow.pop %v387
    %v389 = vld [vmem:[%s7] sm:$0xff]
    %v390 = vld [vmem:[%s7 + $0x8] sm:$0xff]
    %v391 = vld [vmem:[%s7 + $0x10] sm:$0xff]
    %v392 = vld [vmem:[%s7 + $0x18] sm:$0xff]
    %v393 = vld [vmem:[%s7 + $0x20] sm:$0xff]
    %v394 = vld [vmem:[%s7 + $0x28] sm:$0xff]
    %v395 = vld [vmem:[%s7 + $0x30] sm:$0xff]
    %v396 = vld [vmem:[%s7 + $0x38] sm:$0xff]
    %v397 = vld [vmem:[%s7 + $0x40] sm:$0xff]
    %v398 = vld [vmem:[%s7 + $0x48] sm:$0xff]
    %v399 = vld [vmem:[%s7 + $0x50] sm:$0xff]
    %v400 = vld [vmem:[%s7 + $0x58] sm:$0xff]
    %v401 = vld [vmem:[%s7 + $0x60] sm:$0xff]
    %v402 = vld [vmem:[%s7 + $0x68] sm:$0xff]
    %v403 = vld [vmem:[%s7 + $0x70] sm:$0xff]
    %v404 = vld [vmem:[%s7 + $0x78] sm:$0xff]
    %v405 = vld [vmem:[%s7 + $0x80] sm:$0xff]
    %v406 = vld [vmem:[%s7 + $0x88] sm:$0xff]
    %v407 = vld [vmem:[%s7 + $0x90] sm:$0xff]
    %v408 = vld [vmem:[%s7 + $0x98] sm:$0xff]
    %v409 = vld [vmem:[%s7 + $0xa0] sm:$0xff]
    %v410 = vld [vmem:[%s7 + $0xa8] sm:$0xff]
    %v411 = vld [vmem:[%s7 + $0xb0] sm:$0xff]
    %v412 = vld [vmem:[%s7 + $0xb8] sm:$0xff]
    %v413 = vld [vmem:[%s7 + $0xc0] sm:$0xff]
    %v414 = vld [vmem:[%s7 + $0xc8] sm:$0xff]
    %v415 = vld [vmem:[%s7 + $0xd0] sm:$0xff]
    %v416 = vld [vmem:[%s7 + $0xd8] sm:$0xff]
    %v417 = vld [vmem:[%s7 + $0xe0] sm:$0xff]
    %v418 = vld [vmem:[%s7 + $0xe8] sm:$0xff]
    %v419 = vld [vmem:[%s7 + $0xf0] sm:$0xff]
    %v420 = vld [vmem:[%s7 + $0xf8] sm:$0xff]
    %421 = vmatpush.msra.mxu0 %v404
    %422 = vmatpush.msra.mxu0 %v403
    %423 = vmatpush.msra.mxu0 %v402
    %424 = vmatpush.msra.mxu0 %v401
    %425 = vmatpush.msra.mxu0 %v400
    %426 = vmatpush.msra.mxu0 %v399
    %427 = vmatpush.msra.mxu0 %v398
    %428 = vmatpush.msra.mxu0 %v397
    %429 = vmatpush.msra.mxu0 %v396
    %430 = vmatpush.msra.mxu0 %v395
    %431 = vmatpush.msra.mxu0 %v394
    %432 = vmatpush.msra.mxu0 %v393
    %433 = vmatpush.msra.mxu0 %v392
    %434 = vmatpush.msra.mxu0 %v391
    %435 = vmatpush.msra.mxu0 %v390
    %436 = vmatpush.msra.mxu0 %v389
    %437 = vmatmul.f32.gmra.mxu0 %v386
    %v438 = vpop.f32.mrf.mxu0
    %v439 = vadd.f32 0.0, %v438
    %440 = vdwg.mxu0
    %441 = vmatpush.msra.mxu0 %v420
    %442 = vmatpush.msra.mxu0 %v419
    %443 = vmatpush.msra.mxu0 %v418
    %444 = vmatpush.msra.mxu0 %v417
    %445 = vmatpush.msra.mxu0 %v416
    %446 = vmatpush.msra.mxu0 %v415
    %447 = vmatpush.msra.mxu0 %v414
    %448 = vmatpush.msra.mxu0 %v413
    %449 = vmatpush.msra.mxu0 %v412
    %450 = vmatpush.msra.mxu0 %v411
    %451 = vmatpush.msra.mxu0 %v410
    %452 = vmatpush.msra.mxu0 %v409
    %453 = vmatpush.msra.mxu0 %v408
    %454 = vmatpush.msra.mxu0 %v407
    %455 = vmatpush.msra.mxu0 %v406
    %456 = vmatpush.msra.mxu0 %v405
    %457 = vmatmul.f32.gmra.mxu0 %v388
    %v458 = vpop.f32.mrf.mxu0
    %v459 = vadd.f32 %v439, %v458
    %460 = vdwg.mxu0
    %v461 = vrcp.pop %v459
    %v462 = vmul.f32 %v459, %v461
    %v463 = vsub.f32 1.0, %v462
    %v464 = vmul.f32 %v461, %v463
    %v465 = vadd.f32 %v461, %v464
    %vm466 = vweird.f32 %v459
    %vm467 = vweird.f32 %v461
    %vm468 = vmor %vm466, %vm467
    %v469 = vsel %vm468, %v461, %v465
    %v470 = vand.u32 2147483647, %v459
    %vm471 = vcmp.eq.f32.partialorder %v470, 8.507059e+37
    %v472 = vand.u32 %v459, 2147483648
    %v473 = vor.u32 1.1754944e-38, %v472
    %v474 = vsel %vm471, %v473, %v469
    %v475 = vmul.f32 1.0, %v474
    %v476 = vld [vmem:[#allocation11] sm:$0xff]
    %478 = vst [vmem:[#allocation1] ss:$2 sm:$0xff] %v476
    %v479 = vld.sshfl [vmem:[#allocation1] sm:$0xff pattern:$0x75316420]
    %v480 = vld.sshfl [vmem:[#allocation1 + $0x8] sm:$0xff pattern:$0x75316420]
    %vm481 = vcmask 31744
    %v483 = vsel %vm481, %v475, 0
    %vm485 = vcmask 1043456
    %v486 = vsel %vm485, %v479, 0
    %v488 = vsel %vm485, %v480, 0
    %490 = vmatpush.msra.mxu0 0.0
    %491 = vmatpush.msra.mxu0 0.0
    %492 = vmatpush.msra.mxu0 0.0
    %493 = vmatpush.msra.mxu0 0.0
    %494 = vmatpush.msra.mxu0 0.0
    %495 = vmatpush.msra.mxu0 0.0
    %496 = vmatpush.msra.mxu0 0.0
    %497 = vmatpush.msra.mxu0 0.0
    %498 = vmatpush.msra.mxu0 0.0
    %499 = vmatpush.msra.mxu0 0.0
    %500 = vmatpush.msra.mxu0 0.0
    %501 = vmatpush.msra.mxu0 0.0
    %502 = vmatpush.msra.mxu0 0.0
    %503 = vmatpush.msra.mxu0 0.0
    %504 = vmatpush.msra.mxu0 0.0
    %505 = vmatpush.msra.mxu0 %v486
    %506 = vmatmul.f32.gmra.mxu0 %v483
    %v507 = vpop.f32.mrf.mxu0
    %v508 = vadd.f32 0.0, %v507
    %509 = vdwg.mxu0
    %510 = vmatpush.msra.mxu0 0.0
    %511 = vmatpush.msra.mxu0 0.0
    %512 = vmatpush.msra.mxu0 0.0
    %513 = vmatpush.msra.mxu0 0.0
    %514 = vmatpush.msra.mxu0 0.0
    %515 = vmatpush.msra.mxu0 0.0
    %516 = vmatpush.msra.mxu0 0.0
    %517 = vmatpush.msra.mxu0 0.0
    %518 = vmatpush.msra.mxu0 0.0
    %519 = vmatpush.msra.mxu0 0.0
    %520 = vmatpush.msra.mxu0 0.0
    %521 = vmatpush.msra.mxu0 0.0
    %522 = vmatpush.msra.mxu0 0.0
    %523 = vmatpush.msra.mxu0 0.0
    %524 = vmatpush.msra.mxu0 0.0
    %525 = vmatpush.msra.mxu0 %v488
    %526 = vmatmul.f32.gmra.mxu0 %v483
    %v527 = vpop.f32.mrf.mxu0
    %v528 = vadd.f32 0.0, %v527
    %529 = vdwg.mxu0
    %v530 = vmul.f32 %v386, %v508
    %v531 = vmul.f32 %v388, %v528
    %v532 = vmax.f32 %v530, 0.001
    %v533 = vmax.f32 %v531, 0.001
    %v534 = vld [vmem:[#allocation13] sm:$0xff]
    %v535 = vld [vmem:[#allocation13 + $0x8] sm:$0xff]
    %v536 = vld [vmem:[#allocation13 + $0x10] sm:$0xff]
    %v537 = vld [vmem:[#allocation13 + $0x18] sm:$0xff]
    %v538 = vld [vmem:[#allocation13 + $0x20] sm:$0xff]
    %v539 = vld [vmem:[#allocation13 + $0x28] sm:$0xff]
    %v540 = vld [vmem:[#allocation13 + $0x30] sm:$0xff]
    %v541 = vld [vmem:[#allocation13 + $0x38] sm:$0xff]
    %v542 = vld [vmem:[#allocation13 + $0x40] sm:$0xff]
    %v543 = vld [vmem:[#allocation13 + $0x48] sm:$0xff]
    %v544 = vld [vmem:[#allocation13 + $0x50] sm:$0xff]
    %v545 = vld [vmem:[#allocation13 + $0x58] sm:$0xff]
    %v546 = vld [vmem:[#allocation13 + $0x60] sm:$0xff]
    %v547 = vld [vmem:[#allocation13 + $0x68] sm:$0xff]
    %v548 = vld [vmem:[#allocation13 + $0x70] sm:$0xff]
    %v549 = vld [vmem:[#allocation13 + $0x78] sm:$0xff]
    %v550 = vld [vmem:[#allocation13 + $0x80] sm:$0xff]
    %v551 = vld [vmem:[#allocation13 + $0x88] sm:$0xff]
    %v552 = vld [vmem:[#allocation13 + $0x90] sm:$0xff]
    %v553 = vld [vmem:[#allocation13 + $0x98] sm:$0xff]
    %v554 = vld [vmem:[#allocation13 + $0xa0] sm:$0xff]
    %v555 = vld [vmem:[#allocation13 + $0xa8] sm:$0xff]
    %v556 = vld [vmem:[#allocation13 + $0xb0] sm:$0xff]
    %v557 = vld [vmem:[#allocation13 + $0xb8] sm:$0xff]
    %v558 = vld [vmem:[#allocation13 + $0xc0] sm:$0xff]
    %v559 = vld [vmem:[#allocation13 + $0xc8] sm:$0xff]
    %v560 = vld [vmem:[#allocation13 + $0xd0] sm:$0xff]
    %v561 = vld [vmem:[#allocation13 + $0xd8] sm:$0xff]
    %v562 = vld [vmem:[#allocation13 + $0xe0] sm:$0xff]
    %v563 = vld [vmem:[#allocation13 + $0xe8] sm:$0xff]
    %v564 = vld [vmem:[#allocation13 + $0xf0] sm:$0xff]
    %v565 = vld [vmem:[#allocation13 + $0xf8] sm:$0xff]
    %566 = vmatpush.msra.mxu0 %v549
    %567 = vmatpush.msra.mxu0 %v548
    %568 = vmatpush.msra.mxu0 %v547
    %569 = vmatpush.msra.mxu0 %v546
    %570 = vmatpush.msra.mxu0 %v545
    %571 = vmatpush.msra.mxu0 %v544
    %572 = vmatpush.msra.mxu0 %v543
    %573 = vmatpush.msra.mxu0 %v542
    %574 = vmatpush.msra.mxu0 %v541
    %575 = vmatpush.msra.mxu0 %v540
    %576 = vmatpush.msra.mxu0 %v539
    %577 = vmatpush.msra.mxu0 %v538
    %578 = vmatpush.msra.mxu0 %v537
    %579 = vmatpush.msra.mxu0 %v536
    %580 = vmatpush.msra.mxu0 %v535
    %581 = vmatpush.msra.mxu0 %v534
    %582 = vmatmul.f32.gmra.mxu0 %v532
    %v583 = vpop.f32.mrf.mxu0
    %v584 = vadd.f32 0.0, %v583
    %585 = vdwg.mxu0
    %586 = vmatpush.msra.mxu0 %v565
    %587 = vmatpush.msra.mxu0 %v564
    %588 = vmatpush.msra.mxu0 %v563
    %589 = vmatpush.msra.mxu0 %v562
    %590 = vmatpush.msra.mxu0 %v561
    %591 = vmatpush.msra.mxu0 %v560
    %592 = vmatpush.msra.mxu0 %v559
    %593 = vmatpush.msra.mxu0 %v558
    %594 = vmatpush.msra.mxu0 %v557
    %595 = vmatpush.msra.mxu0 %v556
    %596 = vmatpush.msra.mxu0 %v555
    %597 = vmatpush.msra.mxu0 %v554
    %598 = vmatpush.msra.mxu0 %v553
    %599 = vmatpush.msra.mxu0 %v552
    %600 = vmatpush.msra.mxu0 %v551
    %601 = vmatpush.msra.mxu0 %v550
    %602 = vmatmul.f32.gmra.mxu0 %v533
    %v603 = vpop.f32.mrf.mxu0
    %v604 = vadd.f32 %v584, %v603
    %605 = vdwg.mxu0
    %606 = vst [vmem:[#allocation14] sm:$0xff] %v604
    // Predicated region
    $region74: #{tpu_custom_call.1} parent=1 // pred_check
      _
    $region75: #{tpu_custom_call.1} parent=1 // pred_check_branch
      %608 = sbr.rel (0) target = $region77
    $region76: #{tpu_custom_call.1} parent=1 // pred_region
      %610 = vsyncadd [#allocation4], 0
      %s612 = sshll.u32 [#allocation14], 4
      %s613 = int_to_ptr.vmem [resolvable:$true] %s612
      %s614 = sshll.u32 %s11, 4
      %s615 = int_to_ptr.hbm [resolvable:$true] %s614
      %617 = dma.vmem_to_hbm [thread:$0]  %s613, 128, %s615, [#allocation4]
    $region77: #{tpu_custom_call.1} parent=1 // pred_fallthru
      _
    // Predicated region
    $region78: #{tpu_custom_call.1} parent=1 // pred_check
      _
    $region79: #{tpu_custom_call.1} parent=1 // pred_check_branch
      %619 = sbr.rel (0) target = $region81
    $region80: #{tpu_custom_call.1} parent=1 // pred_region
      %621 = dma.done [#allocation4], 128
    $region81: #{tpu_custom_call.1} parent=1 // pred_fallthru
      _
    %622 = vsyncpa [#allocation3], 1
    %623 = vsyncpa [#allocation6], 1
    %624 = vsyncpa [#allocation9], 1
    %625 = vsyncpa [#allocation12], 1
    %626 = vsyncpa [#allocation4], 1

</llo_original>
